<compile_context>
chip_gen: v5e
topology: v5e:2x2
jax: 0.10.0
libtpu: 0.0.40
codegen_flags: <defaults>
</compile_context>

<pallas_src>
import functools

import jax
import jax.numpy as jnp
import numpy as np
from jax.experimental import pallas as pl
from jax.experimental.pallas import tpu as pltpu

# Scoped-VMEM budget: safe on v5e/v6e (128 MiB physical) and v7x (64 MiB physical).
_VMEM_LIMIT_BYTES = 48 * 1024 * 1024
# Budget for the pipelined block buffers (leaves headroom inside _VMEM_LIMIT_BYTES
# for kernel intermediates such as the f32 mask / centered tile).
_BUFFER_BUDGET_BYTES = 24 * 1024 * 1024
_TARGET_BLOCK_BYTES = 4 << 20  # aim for ~4 MiB (padded) data block per grid step


# ----------------------------- helpers ------------------------------------


def _round_up(x, m):
    return ((x + m - 1) // m) * m


def _choose_tb(B, S, C, data_itemsize):
    """Pick a batch tile TB that divides B, keeps the *padded* VMEM footprint of the
    double-buffered blocks within budget, keeps the data block around
    _TARGET_BLOCK_BYTES, and leaves >=2 (ideally >=4) grid steps for megacore."""
    c_pad = _round_up(C, 128)
    # Sublane tile depends on packing: f32 -> 8, bf16 -> 16, int8 -> 32.
    sub_data = max(8, 32 // max(1, data_itemsize))
    s_pad_data = _round_up(S, sub_data)
    s_pad_i8 = _round_up(S, 32)

    data_row = s_pad_data * c_pad * data_itemsize       # data block / batch row
    out_row = data_row                                  # scaled-output block
    obs_row = s_pad_i8 * c_pad                          # int8 mask block
    # 2x for double buffering of the pipelined blocks, plus ~3 data-sized
    # intermediates (mask cast, centered, masked products) inside the kernel body.
    per_row = 2 * (data_row + out_row + obs_row) + 3 * data_row

    cap = max(1, min(B, _BUFFER_BUDGET_BYTES // max(per_row, 1)))
    cap = min(cap, max(1, _TARGET_BLOCK_BYTES // max(data_row, 1)))
    if B >= 4:
        cap = min(cap, max(1, B // 4))
    elif B >= 2:
        cap = min(cap, max(1, B // 2))
    cap = max(cap, 1)
    for tb in range(cap, 0, -1):
        if B % tb == 0:
            return tb
    return 1


def _prep_mask(observed_indicator):
    """Keep the mask narrow: bool -> int8 (1 B/elem); cast to f32 inside the kernel."""
    if observed_indicator.dtype == jnp.bool_:
        return observed_indicator.astype(jnp.int8)
    return observed_indicator


def _compiler_params():
    return pltpu.CompilerParams(
        dimension_semantics=("parallel",),
        vmem_limit_bytes=_VMEM_LIMIT_BYTES,
    )


# ----------------------------- kernels -----------------------------------


def _std_scaler_kernel(data_ref, obs_ref, scaled_ref, loc_ref, scale_ref, *,
                       minimum_scale):
    # Block is (TB, S, C); reduce over the sequence axis (axis=1).
    data = data_ref[...]
    obs = obs_ref[...].astype(data.dtype)

    denom = jnp.maximum(jnp.sum(obs, axis=1, keepdims=True), 1.0)        # (TB,1,C)
    inv_denom = 1.0 / denom                                              # tiny, exact
    loc = jnp.sum(data * obs, axis=1, keepdims=True) * inv_denom         # (TB,1,C)

    centered = data - loc                                                # reused
    var = jnp.sum((centered * obs) ** 2, axis=1, keepdims=True) * inv_denom
    scale = jnp.sqrt(var + minimum_scale)
    inv_scale = 1.0 / scale                                              # tiny, exact

    scaled_ref[...] = centered * inv_scale   # multiply instead of full-tile divide
    loc_ref[...] = loc
    scale_ref[...] = scale


def _mean_scaler_single_kernel(data_ref, obs_ref, scaled_ref, loc_ref, scale_ref, *,
                               minimum_scale, default_scale):
    # Used only when default_scale is given explicitly (no cross-batch reduction).
    data = data_ref[...]
    obs = obs_ref[...].astype(data.dtype)

    ts_sum = jnp.sum(jnp.abs(data * obs), axis=1, keepdims=True)         # (TB,1,C)
    num_obs = jnp.sum(obs, axis=1, keepdims=True)                        # (TB,1,C)
    scale = ts_sum / jnp.maximum(num_obs, 1.0)
    scale = jnp.where(num_obs > 0, scale, jnp.full_like(scale, default_scale))
    scale = jnp.maximum(scale, minimum_scale)
    inv_scale = 1.0 / scale

    scaled_ref[...] = data * inv_scale
    loc_ref[...] = jnp.zeros_like(scale)
    scale_ref[...] = scale


def _mean_stats_kernel(data_ref, obs_ref, ts_sum_ref, num_obs_ref):
    # Pass 1 of the default-scale path: per-batch stats only.
    data = data_ref[...]
    obs = obs_ref[...].astype(data.dtype)
    ts_sum_ref[...] = jnp.sum(jnp.abs(data * obs), axis=1, keepdims=True)
    num_obs_ref[...] = jnp.sum(obs, axis=1, keepdims=True)


def _mean_apply_kernel(data_ref, inv_scale_ref, scaled_ref):
    # Pass 2: apply the (precomputed) inverse scale.
    scaled_ref[...] = data_ref[...] * inv_scale_ref[...]


# ----------------------------- wrappers -----------------------------------


def patchtst_std_scaler(data, observed_indicator, *, minimum_scale=1e-5):
    B, S, C = data.shape
    obs = _prep_mask(observed_indicator)
    TB = _choose_tb(B, S, C, data.dtype.itemsize)
    grid = (B // TB,)
    kernel = functools.partial(_std_scaler_kernel, minimum_scale=minimum_scale)
    return pl.pallas_call(
        kernel,
        out_shape=(
            jax.ShapeDtypeStruct((B, S, C), data.dtype),
            jax.ShapeDtypeStruct((B, 1, C), data.dtype),
            jax.ShapeDtypeStruct((B, 1, C), data.dtype),
        ),
        grid=grid,
        in_specs=[
            pl.BlockSpec((TB, S, C), lambda b: (b, 0, 0)),
            pl.BlockSpec((TB, S, C), lambda b: (b, 0, 0)),
        ],
        out_specs=(
            pl.BlockSpec((TB, S, C), lambda b: (b, 0, 0)),
            pl.BlockSpec((TB, 1, C), lambda b: (b, 0, 0)),
            pl.BlockSpec((TB, 1, C), lambda b: (b, 0, 0)),
        ),
        compiler_params=_compiler_params(),
    )(data, obs)


def patchtst_mean_scaler(data, observed_indicator, *, minimum_scale=1e-10,
                         default_scale=None):
    B, S, C = data.shape
    obs = _prep_mask(observed_indicator)
    TB = _choose_tb(B, S, C, data.dtype.itemsize)
    grid = (B // TB,)
    cp = _compiler_params()

    if default_scale is not None:
        kernel = functools.partial(
            _mean_scaler_single_kernel,
            minimum_scale=minimum_scale,
            default_scale=float(default_scale),
        )
        return pl.pallas_call(
            kernel,
            out_shape=(
                jax.ShapeDtypeStruct((B, S, C), data.dtype),
                jax.ShapeDtypeStruct((B, 1, C), data.dtype),
                jax.ShapeDtypeStruct((B, 1, C), data.dtype),
            ),
            grid=grid,
            in_specs=[
                pl.BlockSpec((TB, S, C), lambda b: (b, 0, 0)),
                pl.BlockSpec((TB, S, C), lambda b: (b, 0, 0)),
            ],
            out_specs=(
                pl.BlockSpec((TB, S, C), lambda b: (b, 0, 0)),
                pl.BlockSpec((TB, 1, C), lambda b: (b, 0, 0)),
                pl.BlockSpec((TB, 1, C), lambda b: (b, 0, 0)),
            ),
            compiler_params=cp,
        )(data, obs)

    # default_scale is None -> needs a cross-batch reduction.  Two pipelined,
    # gridded passes + tiny (B,1,C) scale math in plain JAX.
    ts_sum, num_obs = pl.pallas_call(
        _mean_stats_kernel,
        out_shape=(
            jax.ShapeDtypeStruct((B, 1, C), data.dtype),
            jax.ShapeDtypeStruct((B, 1, C), data.dtype),
        ),
        grid=grid,
        in_specs=[
            pl.BlockSpec((TB, S, C), lambda b: (b, 0, 0)),
            pl.BlockSpec((TB, S, C), lambda b: (b, 0, 0)),
        ],
        out_specs=(
            pl.BlockSpec((TB, 1, C), lambda b: (b, 0, 0)),
            pl.BlockSpec((TB, 1, C), lambda b: (b, 0, 0)),
        ),
        compiler_params=cp,
    )(data, obs)

    # Tiny (B,1,C) / (1,C) math: negligible HBM traffic, done in plain JAX.
    scale = ts_sum / jnp.maximum(num_obs, 1.0)
    batch_sum = jnp.sum(ts_sum, axis=0)                                  # (1,C)
    batch_obs = jnp.maximum(jnp.sum(num_obs, axis=0), 1.0)               # (1,C)
    def_scale = batch_sum / batch_obs                                    # broadcasts vs (B,1,C)
    scale = jnp.where(num_obs > 0, scale, def_scale)
    scale = jnp.maximum(scale, minimum_scale)
    inv_scale = 1.0 / scale

    scaled = pl.pallas_call(
        _mean_apply_kernel,
        out_shape=jax.ShapeDtypeStruct((B, S, C), data.dtype),
        grid=grid,
        in_specs=[
            pl.BlockSpec((TB, S, C), lambda b: (b, 0, 0)),
            pl.BlockSpec((TB, 1, C), lambda b: (b, 0, 0)),
        ],
        out_specs=pl.BlockSpec((TB, S, C), lambda b: (b, 0, 0)),
        compiler_params=cp,
    )(data, inv_scale)

    loc = jnp.zeros_like(scale)
    return scaled, loc, scale


def patchtst_nop_scaler(data, observed_indicator=None):
    # A Pallas copy kernel here would be pure wasted HBM traffic.
    # The NOP scaler is an identity on data with zeros/ones stats.
    B, S, C = data.shape
    loc = jnp.zeros((B, 1, C), data.dtype)
    scale = jnp.ones((B, 1, C), data.dtype)
    return data, loc, scale


def patchtst_scaler(data, observed_indicator, *, scaling="std",
                    minimum_scale=None, default_scale=None):
    """Mirrors PatchTSTScaler.forward dispatch on config.scaling."""
    if scaling == "mean" or scaling is True:
        return patchtst_mean_scaler(
            data, observed_indicator,
            minimum_scale=1e-10 if minimum_scale is None else minimum_scale,
            default_scale=default_scale,
        )
    elif scaling == "std":
        return patchtst_std_scaler(
            data, observed_indicator,
            minimum_scale=1e-5 if minimum_scale is None else minimum_scale,
        )
    else:
        return patchtst_nop_scaler(data, observed_indicator)


# ----------------------------- references ---------------------------------


def _std_ref(data, obs, minimum_scale=1e-5):
    obs = obs.astype(data.dtype)
    denom = jnp.clip(jnp.sum(obs, axis=1, keepdims=True), min=1.0)
    loc = jnp.sum(data * obs, axis=1, keepdims=True) / denom
    var = jnp.sum(((data - loc) * obs) ** 2, axis=1, keepdims=True) / denom
    scale = jnp.sqrt(var + minimum_scale)
    return (data - loc) / scale, loc, scale


def _mean_ref(data, obs, minimum_scale=1e-10, default_scale=None):
    obs = obs.astype(data.dtype)
    ts_sum = jnp.sum(jnp.abs(data * obs), axis=1, keepdims=True)
    num_obs = jnp.sum(obs, axis=1, keepdims=True)
    scale = ts_sum / jnp.clip(num_obs, min=1.0)
    if default_scale is None:
        batch_sum = jnp.sum(ts_sum, axis=0)
        batch_obs = jnp.clip(jnp.sum(num_obs, axis=0), min=1.0)
        ds = jnp.squeeze(batch_sum / batch_obs)
    else:
        ds = default_scale * jnp.ones_like(scale)
    scale = jnp.where(num_obs > 0, scale, ds)
    scale = jnp.clip(scale, min=minimum_scale)
    return data / scale, jnp.zeros_like(scale), scale


# ----------------------------- main ----------------------------------------

if __name__ == "__main__":
    key = jax.random.PRNGKey(0)

    # Two shape sets: small (TB=1) and one that exercises TB>1 batch fusion.
    for (B, S, C) in [(2, 16, 8), (8, 32, 16)]:
        k1, k2 = jax.random.split(jax.random.fold_in(key, B))
        data = jax.random.normal(k1, (B, S, C), dtype=jnp.float32)
        # Bool mask, like the PyTorch BoolTensor; passed narrow (int8) to the kernels.
        observed = jax.random.uniform(k2, (B, S, C)) > 0.3
        # One fully-unobserved (batch, channel) to exercise the default-scale path.
        observed = observed.at[0, :, 0].set(False)
        obs_f = observed.astype(jnp.float32)

        # std (PatchTST default config.scaling == "std")
        scaled, loc, scale = patchtst_scaler(data, observed, scaling="std")
        jax.block_until_ready((scaled, loc, scale))
        r_scaled, r_loc, r_scale = _std_ref(data, obs_f)
        np.testing.assert_allclose(np.asarray(scaled), np.asarray(r_scaled), atol=1e-5, rtol=1e-5)
        np.testing.assert_allclose(np.asarray(loc), np.asarray(r_loc), atol=1e-5, rtol=1e-5)
        np.testing.assert_allclose(np.asarray(scale), np.asarray(r_scale), atol=1e-5, rtol=1e-5)

        # mean, default_scale=None (two-pass path with cross-batch default scale)
        m_scaled, m_loc, m_scale = patchtst_scaler(data, observed, scaling="mean")
        jax.block_until_ready((m_scaled, m_loc, m_scale))
        rm_scaled, rm_loc, rm_scale = _mean_ref(data, obs_f)
        np.testing.assert_allclose(np.asarray(m_scaled), np.asarray(rm_scaled), atol=1e-5, rtol=1e-5)
        np.testing.assert_allclose(np.asarray(m_loc), np.asarray(rm_loc), atol=1e-5, rtol=1e-5)
        np.testing.assert_allclose(np.asarray(m_scale), np.asarray(rm_scale), atol=1e-5, rtol=1e-5)

        # mean with explicit default_scale (single-pass gridded kernel)
        d_scaled, d_loc, d_scale = patchtst_scaler(
            data, observed, scaling="mean", default_scale=2.5)
        jax.block_until_ready((d_scaled, d_loc, d_scale))
        rd_scaled, rd_loc, rd_scale = _mean_ref(data, obs_f, default_scale=2.5)
        np.testing.assert_allclose(np.asarray(d_scaled), np.asarray(rd_scaled), atol=1e-5, rtol=1e-5)
        np.testing.assert_allclose(np.asarray(d_scale), np.asarray(rd_scale), atol=1e-5, rtol=1e-5)

        # nop
        n_scaled, n_loc, n_scale = patchtst_scaler(data, observed, scaling=None)
        jax.block_until_ready((n_scaled, n_loc, n_scale))
        np.testing.assert_allclose(np.asarray(n_scaled), np.asarray(data), atol=0, rtol=0)
        np.testing.assert_allclose(np.asarray(n_loc), np.zeros((B, 1, C), np.float32))
        np.testing.assert_allclose(np.asarray(n_scale), np.ones((B, 1, C), np.float32))

    print("KERNEL_OK")
</pallas_src>

<mosaic_0001>
module attributes {stable_mosaic.version = 11 : i64} {
  func.func @_std_scaler_kernel(%arg0: i32, %arg1: memref<1x16x8xf32, #tpu.memory_space<vmem>>, %arg2: memref<1x16x8xi8, #tpu.memory_space<vmem>>, %arg3: memref<1x16x8xf32, #tpu.memory_space<vmem>>, %arg4: memref<1x1x8xf32, #tpu.memory_space<vmem>>, %arg5: memref<1x1x8xf32, #tpu.memory_space<vmem>>) attributes {dimension_semantics = [#tpu.dimension_semantics<parallel>], iteration_bounds = array<i64: 2>, scalar_prefetch = 0 : i64, scratch_operands = 0 : i64, tpu.core_type = #tpu.core_type<tc>, window_params = [{transform_indices = @transform_0, window_bounds = array<i64: 1, 16, 8>}, {transform_indices = @transform_1, window_bounds = array<i64: 1, 16, 8>}, {transform_indices = @transform_2, window_bounds = array<i64: 1, 16, 8>}, {transform_indices = @transform_3, window_bounds = array<i64: 1, 1, 8>}, {transform_indices = @transform_4, window_bounds = array<i64: 1, 1, 8>}]} {
    %c0 = arith.constant 0 : index
    %c0_0 = arith.constant 0 : index
    %c0_1 = arith.constant 0 : index
    %0 = vector.load %arg1[%c0, %c0_0, %c0_1] : memref<1x16x8xf32, #tpu.memory_space<vmem>>, vector<1x16x8xf32>
    %c0_2 = arith.constant 0 : index
    %c0_3 = arith.constant 0 : index
    %c0_4 = arith.constant 0 : index
    %1 = vector.load %arg2[%c0_2, %c0_3, %c0_4] : memref<1x16x8xi8, #tpu.memory_space<vmem>>, vector<1x16x8xi8>
    %2 = arith.sitofp %1 : vector<1x16x8xi8> to vector<1x16x8xf32>
    %cst = arith.constant dense<0.000000e+00> : vector<1x8xf32>
    %3 = vector.multi_reduction <add>, %2, %cst [1] : vector<1x16x8xf32> to vector<1x8xf32>
    %4 = vector.shape_cast %3 : vector<1x8xf32> to vector<1x1x8xf32>
    %cst_5 = arith.constant 1.000000e+00 : f32
    %5 = vector.broadcast %cst_5 : f32 to vector<1x1x8xf32>
    %6 = arith.maximumf %4, %5 : vector<1x1x8xf32>
    %cst_6 = arith.constant 1.000000e+00 : f32
    %7 = vector.broadcast %cst_6 : f32 to vector<1x1x8xf32>
    %8 = arith.divf %7, %6 : vector<1x1x8xf32>
    %9 = arith.mulf %0, %2 : vector<1x16x8xf32>
    %cst_7 = arith.constant dense<0.000000e+00> : vector<1x8xf32>
    %10 = vector.multi_reduction <add>, %9, %cst_7 [1] : vector<1x16x8xf32> to vector<1x8xf32>
    %11 = vector.shape_cast %10 : vector<1x8xf32> to vector<1x1x8xf32>
    %12 = arith.mulf %11, %8 : vector<1x1x8xf32>
    %13 = vector.broadcast %12 : vector<1x1x8xf32> to vector<1x16x8xf32>
    %14 = arith.subf %0, %13 : vector<1x16x8xf32>
    %15 = arith.mulf %14, %2 : vector<1x16x8xf32>
    %16 = arith.mulf %15, %15 : vector<1x16x8xf32>
    %cst_8 = arith.constant dense<0.000000e+00> : vector<1x8xf32>
    %17 = vector.multi_reduction <add>, %16, %cst_8 [1] : vector<1x16x8xf32> to vector<1x8xf32>
    %18 = vector.shape_cast %17 : vector<1x8xf32> to vector<1x1x8xf32>
    %19 = arith.mulf %18, %8 : vector<1x1x8xf32>
    %cst_9 = arith.constant 9.99999974E-6 : f32
    %20 = vector.broadcast %cst_9 : f32 to vector<1x1x8xf32>
    %21 = arith.addf %19, %20 : vector<1x1x8xf32>
    %22 = math.sqrt %21 : vector<1x1x8xf32>
    %cst_10 = arith.constant 1.000000e+00 : f32
    %23 = vector.broadcast %cst_10 : f32 to vector<1x1x8xf32>
    %24 = arith.divf %23, %22 : vector<1x1x8xf32>
    %25 = vector.broadcast %24 : vector<1x1x8xf32> to vector<1x16x8xf32>
    %26 = arith.mulf %14, %25 : vector<1x16x8xf32>
    %c0_11 = arith.constant 0 : index
    %c0_12 = arith.constant 0 : index
    %c0_13 = arith.constant 0 : index
    %27 = vector.load %arg3[%c0_11, %c0_12, %c0_13] : memref<1x16x8xf32, #tpu.memory_space<vmem>>, vector<1x16x8xf32>
    tpu.vector_store %arg3[%c0_11, %c0_12, %c0_13], %26 {strides = array<i32>} : memref<1x16x8xf32, #tpu.memory_space<vmem>>, vector<1x16x8xf32>,
    %c0_14 = arith.constant 0 : index
    %c0_15 = arith.constant 0 : index
    %c0_16 = arith.constant 0 : index
    %28 = vector.load %arg4[%c0_14, %c0_15, %c0_16] : memref<1x1x8xf32, #tpu.memory_space<vmem>>, vector<1x1x8xf32>
    tpu.vector_store %arg4[%c0_14, %c0_15, %c0_16], %12 {strides = array<i32>} : memref<1x1x8xf32, #tpu.memory_space<vmem>>, vector<1x1x8xf32>,
    %c0_17 = arith.constant 0 : index
    %c0_18 = arith.constant 0 : index
    %c0_19 = arith.constant 0 : index
    %29 = vector.load %arg5[%c0_17, %c0_18, %c0_19] : memref<1x1x8xf32, #tpu.memory_space<vmem>>, vector<1x1x8xf32>
    tpu.vector_store %arg5[%c0_17, %c0_18, %c0_19], %22 {strides = array<i32>} : memref<1x1x8xf32, #tpu.memory_space<vmem>>, vector<1x1x8xf32>,
    return
  }
  func.func @transform_0(%arg0: i32) -> (i32, i32, i32) {
    %c0_i32 = arith.constant 0 : i32
    %c0_i32_0 = arith.constant 0 : i32
    %c0_i32_1 = arith.constant 0 : i32
    return %arg0, %c0_i32, %c0_i32_0 : i32, i32, i32
  }
  func.func @transform_1(%arg0: i32) -> (i32, i32, i32) {
    %c0_i32 = arith.constant 0 : i32
    %c0_i32_0 = arith.constant 0 : i32
    %c0_i32_1 = arith.constant 0 : i32
    return %arg0, %c0_i32, %c0_i32_0 : i32, i32, i32
  }
  func.func @transform_2(%arg0: i32) -> (i32, i32, i32) {
    %c0_i32 = arith.constant 0 : i32
    %c0_i32_0 = arith.constant 0 : i32
    %c0_i32_1 = arith.constant 0 : i32
    return %arg0, %c0_i32, %c0_i32_0 : i32, i32, i32
  }
  func.func @transform_3(%arg0: i32) -> (i32, i32, i32) {
    %c0_i32 = arith.constant 0 : i32
    %c0_i32_0 = arith.constant 0 : i32
    %c0_i32_1 = arith.constant 0 : i32
    return %arg0, %c0_i32, %c0_i32_0 : i32, i32, i32
  }
  func.func @transform_4(%arg0: i32) -> (i32, i32, i32) {
    %c0_i32 = arith.constant 0 : i32
    %c0_i32_0 = arith.constant 0 : i32
    %c0_i32_1 = arith.constant 0 : i32
    return %arg0, %c0_i32, %c0_i32_0 : i32, i32, i32
  }
}

</mosaic_0001>

<llo_original>
// kernel: tpu_custom_call.1
$region0: #{tpu_custom_call.1}
  #allocation0 [shape = 'u32[]', space=smem, size = 0x4, offset = 0x4, fixed_abs, tag = 'smem constant byte address 0x4 - core index']
  #allocation1 [shape = 'u32[72,128]{1,0:T(1,128)}', space=vmem, size = 0x9000, scoped, tag = 'internal scratch']
  %s0 = inlined_call_operand.vmem [shape: f32[2,16,8], index: 0, kind: input, shape index: {}]
  %s1 = inlined_call_operand.vmem [shape: s8[2,16,8], index: 1, kind: input, shape index: {}]
  %s2 = inlined_call_operand.vmem [shape: f32[2,16,8], index: 2, kind: output, shape index: {0}]
  %s3 = inlined_call_operand.hbm [shape: f32[2,1,8], index: 3, kind: output, shape index: {1}]
  %s4 = inlined_call_operand.hbm [shape: f32[2,1,8], index: 4, kind: output, shape index: {2}]
  %5 = xla_tuple %s2, %s3, %s4
  %s6 = sld [smem:[#allocation0]]
  $region57: #{tpu_custom_call.1} parent=0
    _
  %s8 = ssub.s32 1, %s6
  %s9 = scalar_select 0, %s8, %s6
  $region1: #{tpu_custom_call.1} parent=0
    #allocation2 [shape = 'u8[1024]{0}', space=vmem, size = 0x400, scoped, tag = 'output window, operand 1']
    #allocation3 [shape = 's32[2]{0}', space=sflag, size = 0x8, scoped, tag = 'scoped memory for tpu_custom_call.1']
    #allocation4 [shape = 'u8[1024]{0}', space=vmem, size = 0x400, scoped, tag = 'output window, operand 2']
    #allocation5 [shape = 's32[2]{0}', space=sflag, size = 0x8, scoped, tag = 'scoped memory for tpu_custom_call.1']
    %10 = vsyncpa [#allocation3], 0
    %s11 = scalar_lea.sflag [#allocation3], 1
    %12 = vsyncpa %s11, 0
    %13 = vsyncpa [#allocation5], 0
    %s14 = scalar_lea.sflag [#allocation5], 1
    %15 = vsyncpa %s14, 0
    loop: start=0, step=1, limit=4
    $region2: #{tpu_custom_call.1} parent=1 // loop_pre_header
      _
    $region3: #{tpu_custom_call.1} parent=1 // loop_header
      %s17 = sphi 0, %s21
      %p18 = scmp.ge.s32.totalorder %s17, 4
      %s27 = sphi 0, %s29
      %s30 = sphi 0, %s27
      %s31 = sphi 0, %s30
      %s47 = sphi 0, %s31
      %s53 = sphi 0, %s55
      %s56 = sphi 0, %s53
      %s57 = sphi 0, %s56
      %s73 = sphi 0, %s57
      %s79 = sphi 0, %s81
      %s82 = sphi 0, %s79
      %s83 = sphi 0, %s82
      %s99 = sphi 0, %s83
      %s105 = sphi 0, %s107
      %s108 = sphi 0, %s105
      %s109 = sphi 0, %s108
      %s125 = sphi 0, %s109
      %s131 = sphi 0, %s133
      %s134 = sphi 0, %s131
      %s135 = sphi 0, %s134
      %s151 = sphi 0, %s135
    $region4: #{tpu_custom_call.1} parent=1 // loop_header_branch
      %20 = sbr.rel (%p18) target = $region8
    $region5: #{tpu_custom_call.1} parent=1 // loop_body
      %s22 = ssub.s32 %s17, 1
      %s23 = ssub.s32 %s17, 2
      %s24 = sadd.s32 %s17, 1
      %s25 = ssub.s32 %s17, %s24
      %p26 = scmp.eq.s32.totalorder %s25, 0
      %s28 = sadd.s32 %s27, 1
      %s29 = scalar_select %p26, %s27, %s28
      %p32 = pneg %p26
      %p33 = scmp.eq.s32.totalorder %s17, 1
      %p34 = por %p32, %p33
      %p35 = scmp.ne.s32.totalorder %s27, %s30
      %p36 = scmp.eq.s32.totalorder %s17, 0
      %p37 = por %p35, %p36
      %p38 = scmp.ne.s32.totalorder %s27, %s30
      %p39 = scmp.eq.s32.totalorder %s22, 1
      %p40 = por %p38, %p39
      %p41 = scmp.ne.s32.totalorder %s30, %s31
      %p42 = scmp.eq.s32.totalorder %s22, 0
      %p43 = por %p41, %p42
      %p44 = scmp.ne.s32.totalorder %s30, %s31
      %p45 = scmp.eq.s32.totalorder %s23, 1
      %p46 = por %p44, %p45
      %p48 = scmp.ne.s32.totalorder %s31, %s47
      %p49 = scmp.eq.s32.totalorder %s23, 0
      %p50 = por %p48, %p49
      %s51 = ssub.s32 %s17, %s24
      %p52 = scmp.eq.s32.totalorder %s51, 0
      %s54 = sadd.s32 %s53, 1
      %s55 = scalar_select %p52, %s53, %s54
      %p58 = pneg %p52
      %p59 = scmp.eq.s32.totalorder %s17, 1
      %p60 = por %p58, %p59
      %p61 = scmp.ne.s32.totalorder %s53, %s56
      %p62 = scmp.eq.s32.totalorder %s17, 0
      %p63 = por %p61, %p62
      %p64 = scmp.ne.s32.totalorder %s53, %s56
      %p65 = scmp.eq.s32.totalorder %s22, 1
      %p66 = por %p64, %p65
      %p67 = scmp.ne.s32.totalorder %s56, %s57
      %p68 = scmp.eq.s32.totalorder %s22, 0
      %p69 = por %p67, %p68
      %p70 = scmp.ne.s32.totalorder %s56, %s57
      %p71 = scmp.eq.s32.totalorder %s23, 1
      %p72 = por %p70, %p71
      %p74 = scmp.ne.s32.totalorder %s57, %s73
      %p75 = scmp.eq.s32.totalorder %s23, 0
      %p76 = por %p74, %p75
      %s77 = ssub.s32 %s17, %s24
      %p78 = scmp.eq.s32.totalorder %s77, 0
      %s80 = sadd.s32 %s79, 1
      %s81 = scalar_select %p78, %s79, %s80
      %p84 = pneg %p78
      %p85 = scmp.eq.s32.totalorder %s17, 1
      %p86 = por %p84, %p85
      %p87 = scmp.ne.s32.totalorder %s79, %s82
      %p88 = scmp.eq.s32.totalorder %s17, 0
      %p89 = por %p87, %p88
      %p90 = scmp.ne.s32.totalorder %s79, %s82
      %p91 = scmp.eq.s32.totalorder %s22, 1
      %p92 = por %p90, %p91
      %p93 = scmp.ne.s32.totalorder %s82, %s83
      %p94 = scmp.eq.s32.totalorder %s22, 0
      %p95 = por %p93, %p94
      %p96 = scmp.ne.s32.totalorder %s82, %s83
      %p97 = scmp.eq.s32.totalorder %s23, 1
      %p98 = por %p96, %p97
      %p100 = scmp.ne.s32.totalorder %s83, %s99
      %p101 = scmp.eq.s32.totalorder %s23, 0
      %p102 = por %p100, %p101
      %s103 = ssub.s32 %s17, %s24
      %p104 = scmp.eq.s32.totalorder %s103, 0
      %s106 = sadd.s32 %s105, 1
      %s107 = scalar_select %p104, %s105, %s106
      %p110 = pneg %p104
      %p111 = scmp.eq.s32.totalorder %s17, 1
      %p112 = por %p110, %p111
      %p113 = scmp.ne.s32.totalorder %s105, %s108
      %p114 = scmp.eq.s32.totalorder %s17, 0
      %p115 = por %p113, %p114
      %p116 = scmp.ne.s32.totalorder %s105, %s108
      %p117 = scmp.eq.s32.totalorder %s22, 1
      %p118 = por %p116, %p117
      %p119 = scmp.ne.s32.totalorder %s108, %s109
      %p120 = scmp.eq.s32.totalorder %s22, 0
      %p121 = por %p119, %p120
      %p122 = scmp.ne.s32.totalorder %s108, %s109
      %p123 = scmp.eq.s32.totalorder %s23, 1
      %p124 = por %p122, %p123
      %p126 = scmp.ne.s32.totalorder %s109, %s125
      %p127 = scmp.eq.s32.totalorder %s23, 0
      %p128 = por %p126, %p127
      %s129 = ssub.s32 %s17, %s24
      %p130 = scmp.eq.s32.totalorder %s129, 0
      %s132 = sadd.s32 %s131, 1
      %s133 = scalar_select %p130, %s131, %s132
      %p136 = pneg %p130
      %p137 = scmp.eq.s32.totalorder %s17, 1
      %p138 = por %p136, %p137
      %p139 = scmp.ne.s32.totalorder %s131, %s134
      %p140 = scmp.eq.s32.totalorder %s17, 0
      %p141 = por %p139, %p140
      %p142 = scmp.ne.s32.totalorder %s131, %s134
      %p143 = scmp.eq.s32.totalorder %s22, 1
      %p144 = por %p142, %p143
      %p145 = scmp.ne.s32.totalorder %s134, %s135
      %p146 = scmp.eq.s32.totalorder %s22, 0
      %p147 = por %p145, %p146
      %p148 = scmp.ne.s32.totalorder %s134, %s135
      %p149 = scmp.eq.s32.totalorder %s23, 1
      %p150 = por %p148, %p149
      %p152 = scmp.ne.s32.totalorder %s135, %s151
      %p153 = scmp.eq.s32.totalorder %s23, 0
      %p154 = por %p152, %p153
      %p155 = scmp.le.s32.totalorder 1, %s17
      %p156 = scmp.lt.s32.totalorder %s17, 3
      %p157 = pnand %p155, %p156
      %p158 = pneg %p157
      // Predicated region
      $region9: #{tpu_custom_call.1} parent=5 // pred_check
        _
      $region10: #{tpu_custom_call.1} parent=5 // pred_check_branch
        %160 = sbr.rel (%p157) target = $region12
      $region11: #{tpu_custom_call.1} parent=5 // pred_region
        %s161 = ssub.s32 %s17, 1
      $region12: #{tpu_custom_call.1} parent=5 // pred_fallthru
        _
      %p162 = scmp.lt.s32.totalorder %s17, 2
      // Predicated region
      $region13: #{tpu_custom_call.1} parent=5 // pred_check
        %p163 = pneg %p162
      $region14: #{tpu_custom_call.1} parent=5 // pred_check_branch
        %165 = sbr.rel (%p163) target = $region16
      $region15: #{tpu_custom_call.1} parent=5 // pred_region
        // Predicated region
        $region17: #{tpu_custom_call.1} parent=15 // pred_check
          %p166 = pneg %p37
        $region18: #{tpu_custom_call.1} parent=15 // pred_check_branch
          %168 = sbr.rel (%p166) target = $region20
        $region19: #{tpu_custom_call.1} parent=15 // pred_region
          %p169 = scmp.lt.s32.totalorder %s17, 1
          %s170 = scalar_select %p169, %s17, 1
          %s171 = smul.addr %s170, 2
          %s172 = smul.addr %s171, 8
          %s173 = scalar_lea.vmem %s0, %s172
        $region20: #{tpu_custom_call.1} parent=15 // pred_fallthru
          _
        // Predicated region
        $region21: #{tpu_custom_call.1} parent=15 // pred_check
          %p174 = pneg %p63
        $region22: #{tpu_custom_call.1} parent=15 // pred_check_branch
          %176 = sbr.rel (%p174) target = $region24
        $region23: #{tpu_custom_call.1} parent=15 // pred_region
          %p177 = scmp.lt.s32.totalorder %s17, 1
          %s178 = scalar_select %p177, %s17, 1
          %s179 = smul.addr %s178, 2
          %s180 = smul.addr %s179, 2
          %s181 = scalar_lea.vmem %s1, %s180
        $region24: #{tpu_custom_call.1} parent=15 // pred_fallthru
          _
      $region16: #{tpu_custom_call.1} parent=5 // pred_fallthru
        _
      %p182 = scmp.le.s32.totalorder 1, %s17
      %p183 = scmp.lt.s32.totalorder %s17, 3
      %p184 = pnand %p182, %p183
      %p185 = pneg %p184
      // Predicated region
      $region25: #{tpu_custom_call.1} parent=5 // pred_check
        _
      $region26: #{tpu_custom_call.1} parent=5 // pred_check_branch
        %187 = sbr.rel (%p184) target = $region28
      $region27: #{tpu_custom_call.1} parent=5 // pred_region
        %s188 = ssub.s32 %s17, 1
        %p189 = scmp.lt.s32.totalorder %s22, 1
        %s190 = scalar_select %p189, %s22, 1
        %s191 = smul.addr %s190, 2
        %s192 = smul.addr %s191, 8
        %s193 = scalar_lea.vmem %s0, %s192
        %p194 = pneg %p43
        %p195 = pneg %p40
        %p196 = scmp.lt.s32.totalorder %s22, 1
        %s197 = scalar_select %p196, %s22, 1
        %s198 = smul.addr %s197, 2
        %s199 = smul.addr %s198, 2
        %s200 = scalar_lea.vmem %s1, %s199
        %p201 = pneg %p69
        %p202 = pneg %p66
        %p203 = pneg %p95
        %p204 = pneg %p92
        %p205 = scmp.lt.s32.totalorder %s22, 1
        %s206 = scalar_select %p205, %s22, 1
        %s207 = smul.addr %s206, 2
        %s208 = smul.addr %s207, 8
        %s209 = scalar_lea.vmem %s2, %s208
        %p210 = pneg %p121
        %p211 = pneg %p118
        %s212 = sand.u32 %s108, 1
        %s213 = scalar_lea.sflag [#allocation3], %s212
        %s214 = sand.u32 %s108, 1
        %s215 = scalar_lea.vmem [#allocation2], %s214
        %p216 = pneg %p147
        %p217 = pneg %p144
        %s218 = sand.u32 %s134, 1
        %s219 = scalar_lea.sflag [#allocation5], %s218
        %s220 = sand.u32 %s134, 1
        %s221 = scalar_lea.vmem [#allocation4], %s220
        %p222 = scmp.lt.s32.totalorder %s22, 1
        %s223 = scalar_select %p222, %s22, 1
        %s224 = smul.addr %s223, 2
        %s225 = smul.addr %s224, 8
        %s226 = scalar_lea.vmem %s0, %s225
        %p227 = scmp.lt.s32.totalorder %s22, 1
        %s228 = scalar_select %p227, %s22, 1
        %s229 = smul.addr %s228, 2
        %s230 = smul.addr %s229, 2
        %s231 = scalar_lea.vmem %s1, %s230
        %p232 = scmp.lt.s32.totalorder %s22, 1
        %s233 = scalar_select %p232, %s22, 1
        %s234 = smul.addr %s233, 2
        %s235 = smul.addr %s234, 8
        %s236 = scalar_lea.vmem %s2, %s235
        %v237 = vld [vmem:[%s226] sm:$0xff]
        %v238 = vld [vmem:[%s226 + $0x8] sm:$0xff]
        %v239 = vld [vmem:[%s231] sm:$0x3]
        %v240 = vld [vmem:[%s231 + $0x2] sm:$0x3]
        %v241 = vunpack.c.0.s8 %v239
        %v242 = vunpack.c.0.s8 %v240
        %v243 = vcvt.s32.f32 %v241
        %v244 = vcvt.s32.f32 %v242
        %vm245 = vcmask 64512
        %v246 = vsel %vm245, %v243, 0.0
        %v247 = vsel %vm245, %v244, 0.0
        %v248 = vadd.f32 %v246, %v247
        %v249 = vrot.slane %v248, 4
        %v250 = vadd.f32 %v248, %v249
        %v251 = vrot.slane %v250, 2
        %v252 = vadd.f32 %v250, %v251
        %v253 = vrot.slane %v252, 1
        %v254 = vadd.f32 %v252, %v253
        %v255 = vmax.f32 %v254, 1.0
        %v256 = vrcp.pop %v255
        %v257 = vmul.f32 %v255, %v256
        %v258 = vsub.f32 1.0, %v257
        %v259 = vmul.f32 %v256, %v258
        %v260 = vadd.f32 %v256, %v259
        %vm261 = vweird.f32 %v255
        %vm262 = vweird.f32 %v256
        %vm263 = vmor %vm261, %vm262
        %v264 = vsel %vm263, %v256, %v260
        %v265 = vand.u32 2147483647, %v255
        %vm266 = vcmp.eq.f32.partialorder %v265, 8.507059e+37
        %v267 = vand.u32 %v255, 2147483648
        %v268 = vor.u32 1.1754944e-38, %v267
        %v269 = vsel %vm266, %v268, %v264
        %v270 = vmul.f32 1.0, %v269
        %v271 = vmul.f32 %v237, %v243
        %v272 = vmul.f32 %v238, %v244
        %v273 = vsel %vm245, %v271, 0.0
        %v274 = vsel %vm245, %v272, 0.0
        %v275 = vadd.f32 %v273, %v274
        %v276 = vrot.slane %v275, 4
        %v277 = vadd.f32 %v275, %v276
        %v278 = vrot.slane %v277, 2
        %v279 = vadd.f32 %v277, %v278
        %v280 = vrot.slane %v279, 1
        %v281 = vadd.f32 %v279, %v280
        %v282 = vmul.f32 %v281, %v270
        %v283 = vsub.f32 %v237, %v282
        %v284 = vsub.f32 %v238, %v282
        %v285 = vmul.f32 %v283, %v243
        %v286 = vmul.f32 %v284, %v244
        %v287 = vmul.f32 %v285, %v285
        %v288 = vmul.f32 %v286, %v286
        %v289 = vsel %vm245, %v287, 0.0
        %v290 = vsel %vm245, %v288, 0.0
        %v291 = vadd.f32 %v289, %v290
        %v292 = vrot.slane %v291, 4
        %v293 = vadd.f32 %v291, %v292
        %v294 = vrot.slane %v293, 2
        %v295 = vadd.f32 %v293, %v294
        %v296 = vrot.slane %v295, 1
        %v297 = vadd.f32 %v295, %v296
        %v298 = vmul.f32 %v297, %v270
        %v299 = vadd.f32 %v298, 1e-05
        %v300 = vrsqrt.pop %v299
        %v301 = vmul.f32 %v300, %v299
        %v302 = vmul.f32 %v301, %v300
        %v303 = vmul.f32 0.5, %v302
        %v304 = vsub.f32 1.5, %v303
        %v305 = vmul.f32 %v300, %v304
        %v306 = vmul.f32 %v299, %v305
        %vm307 = vcmp.eq.f32.partialorder %v299, inf
        %v308 = vsel %vm307, %v299, %v306
        %vm309 = vcmp.eq.f32.partialorder %v299, 0.0
        %v310 = vand.u32 %v299, 2147483648
        %v311 = vsel %vm309, %v310, %v308
        %v312 = vrcp.pop %v311
        %v313 = vmul.f32 %v311, %v312
        %v314 = vsub.f32 1.0, %v313
        %v315 = vmul.f32 %v312, %v314
        %v316 = vadd.f32 %v312, %v315
        %vm317 = vweird.f32 %v311
        %vm318 = vweird.f32 %v312
        %vm319 = vmor %vm317, %vm318
        %v320 = vsel %vm319, %v312, %v316
        %v321 = vand.u32 2147483647, %v311
        %vm322 = vcmp.eq.f32.partialorder %v321, 8.507059e+37
        %v323 = vand.u32 %v311, 2147483648
        %v324 = vor.u32 1.1754944e-38, %v323
        %v325 = vsel %vm322, %v324, %v320
        %v326 = vmul.f32 1.0, %v325
        %v327 = vmul.f32 %v283, %v326
        %v328 = vmul.f32 %v284, %v326
        %329 = vst.msk [vmem:[%s236] sm:$0xff] %vm245, %v327
        %330 = vst.msk [vmem:[%s236 + $0x8] sm:$0xff] %vm245, %v328
        %vm331 = vcmask 57344
        %332 = vst.msk [vmem:[%s215] sm:$0x1] %vm331, %v282
        %333 = vst.msk [vmem:[%s221] sm:$0x1] %vm331, %v311
        %p334 = scmp.lt.s32.totalorder %s22, 1
        %s335 = scalar_select %p334, %s22, 1
        %s336 = smul.addr %s335, 2
        %s337 = smul.addr %s336, 8
        %s338 = scalar_lea.vmem %s2, %s337
        %s339 = sand.u32 %s108, 1
        %s340 = scalar_lea.sflag [#allocation3], %s339
        %s341 = sand.u32 %s108, 1
        %s342 = scalar_lea.vmem [#allocation2], %s341
        %s343 = sand.u32 %s134, 1
        %s344 = scalar_lea.sflag [#allocation5], %s343
        %s345 = sand.u32 %s134, 1
        %s346 = scalar_lea.vmem [#allocation4], %s345
        // Predicated region
        $region29: #{tpu_custom_call.1} parent=27 // pred_check
          %p347 = pneg %p92
        $region30: #{tpu_custom_call.1} parent=27 // pred_check_branch
          %349 = sbr.rel (%p347) target = $region32
        $region31: #{tpu_custom_call.1} parent=27 // pred_region
          _
        $region32: #{tpu_custom_call.1} parent=27 // pred_fallthru
          _
        // Predicated region
        $region33: #{tpu_custom_call.1} parent=27 // pred_check
          %p350 = pneg %p118
        $region34: #{tpu_custom_call.1} parent=27 // pred_check_branch
          %352 = sbr.rel (%p350) target = $region36
        $region35: #{tpu_custom_call.1} parent=27 // pred_region
          %354 = vsyncadd %s340, 0
          %s355 = scalar_lea.hbm %s3, %s22
          %s357 = sshll.u32 %s342, 4
          %s358 = int_to_ptr.vmem [resolvable:$true] %s357
          %s359 = sshll.u32 %s355, 4
          %s360 = int_to_ptr.hbm [resolvable:$true] %s359
          %362 = dma.vmem_to_hbm [thread:$0]  %s358, 16, %s360, %s340
        $region36: #{tpu_custom_call.1} parent=27 // pred_fallthru
          _
        // Predicated region
        $region37: #{tpu_custom_call.1} parent=27 // pred_check
          %p363 = pneg %p144
        $region38: #{tpu_custom_call.1} parent=27 // pred_check_branch
          %365 = sbr.rel (%p363) target = $region40
        $region39: #{tpu_custom_call.1} parent=27 // pred_region
          %367 = vsyncadd %s344, 0
          %s368 = scalar_lea.hbm %s4, %s22
          %s370 = sshll.u32 %s346, 4
          %s371 = int_to_ptr.vmem [resolvable:$true] %s370
          %s372 = sshll.u32 %s368, 4
          %s373 = int_to_ptr.hbm [resolvable:$true] %s372
          %375 = dma.vmem_to_hbm [thread:$0]  %s371, 16, %s373, %s344
        $region40: #{tpu_custom_call.1} parent=27 // pred_fallthru
          _
      $region28: #{tpu_custom_call.1} parent=5 // pred_fallthru
        _
      %p376 = scmp.le.s32.totalorder 2, %s17
      // Predicated region
      $region41: #{tpu_custom_call.1} parent=5 // pred_check
        %p377 = pneg %p376
      $region42: #{tpu_custom_call.1} parent=5 // pred_check_branch
        %379 = sbr.rel (%p377) target = $region44
      $region43: #{tpu_custom_call.1} parent=5 // pred_region
        %s380 = ssub.s32 %s17, 2
        // Predicated region
        $region45: #{tpu_custom_call.1} parent=43 // pred_check
          %p381 = pneg %p98
        $region46: #{tpu_custom_call.1} parent=43 // pred_check_branch
          %383 = sbr.rel (%p381) target = $region48
        $region47: #{tpu_custom_call.1} parent=43 // pred_region
          %p384 = scmp.lt.s32.totalorder %s23, 1
          %s385 = scalar_select %p384, %s23, 1
          %s386 = smul.addr %s385, 2
          %s387 = smul.addr %s386, 8
          %s388 = scalar_lea.vmem %s2, %s387
        $region48: #{tpu_custom_call.1} parent=43 // pred_fallthru
          _
        // Predicated region
        $region49: #{tpu_custom_call.1} parent=43 // pred_check
          %p389 = pneg %p124
        $region50: #{tpu_custom_call.1} parent=43 // pred_check_branch
          %391 = sbr.rel (%p389) target = $region52
        $region51: #{tpu_custom_call.1} parent=43 // pred_region
          %s392 = sand.u32 %s109, 1
          %s393 = scalar_lea.sflag [#allocation3], %s392
          %s394 = sand.u32 %s109, 1
          %s395 = scalar_lea.vmem [#allocation2], %s394
          %397 = dma.done %s393, 16
        $region52: #{tpu_custom_call.1} parent=43 // pred_fallthru
          _
        // Predicated region
        $region53: #{tpu_custom_call.1} parent=43 // pred_check
          %p398 = pneg %p150
        $region54: #{tpu_custom_call.1} parent=43 // pred_check_branch
          %400 = sbr.rel (%p398) target = $region56
        $region55: #{tpu_custom_call.1} parent=43 // pred_region
          %s401 = sand.u32 %s135, 1
          %s402 = scalar_lea.sflag [#allocation5], %s401
          %s403 = sand.u32 %s135, 1
          %s404 = scalar_lea.vmem [#allocation4], %s403
          %406 = dma.done %s402, 16
        $region56: #{tpu_custom_call.1} parent=43 // pred_fallthru
          _
      $region44: #{tpu_custom_call.1} parent=5 // pred_fallthru
        _
    $region6: #{tpu_custom_call.1} parent=1 // loop_footer
      %s21 = sadd.s32 1, %s17
    $region7: #{tpu_custom_call.1} parent=1 // loop_footer_branch
      %16 = sbr.rel target = $region3
    $region8: #{tpu_custom_call.1} parent=1 // loop_exit
      _
    %407 = vsyncpa [#allocation3], 1
    %s408 = scalar_lea.sflag [#allocation3], 1
    %409 = vsyncpa %s408, 1
    %410 = vsyncpa [#allocation5], 1
    %s411 = scalar_lea.sflag [#allocation5], 1
    %412 = vsyncpa %s411, 1

</llo_original>
